<compile_context>
chip_gen: v7x
topology: tpu7x:2x2x1
jax: 0.10.0
libtpu: 0.0.40
codegen_flags: <defaults>
</compile_context>

<pallas_src>
import functools
import math

import jax
import jax.numpy as jnp
from jax.experimental import pallas as pl
from jax.experimental.pallas import tpu as pltpu


# ---------------------------------------------------------------------------
# Kernels
# ---------------------------------------------------------------------------
def _linear_kernel(x_ref, w_ref, b_ref, o_ref):
    """y = x @ W.T + b for a 1-output Linear, as multiply + lane-reduce.

    x_ref: (TM, E)   block of flattened rows
    w_ref: (1, E)    PyTorch nn.Linear(E, 1).weight, native layout
    b_ref: (1, 1)    bias
    o_ref: (TM, 1)
    """
    x = x_ref[...].astype(jnp.float32)                    # (TM, E)
    w = w_ref[...]                                        # (1, E) -> broadcast
    y = jnp.sum(x * w, axis=-1, keepdims=True) + b_ref[...]
    o_ref[...] = y.astype(o_ref.dtype)


def _pool_linear_kernel(x_ref, w_ref, b_ref, o_ref, *, inv_seq):
    """permute + AdaptiveAvgPool1d(1) + squeeze + Linear(E, 1), fused.

    x_ref: (TB, S, E) block of the batch
    w_ref: (1, E)
    b_ref: (1, 1)
    o_ref: (TB, 1)
    """
    x = x_ref[...].astype(jnp.float32)                    # (TB, S, E)
    xm = jnp.sum(x, axis=1) * inv_seq                     # (TB, E)  == mean over seq
    y = jnp.sum(xm * w_ref[...], axis=-1, keepdims=True) + b_ref[...]
    o_ref[...] = y.astype(o_ref.dtype)


# ---------------------------------------------------------------------------
# Wrapper
# ---------------------------------------------------------------------------
_TILE_BYTES_BUDGET = 2 << 20   # ~2 MiB per input tile (x2 for double-buffering)


def _row_block(m, bytes_per_row):
    """Largest multiple-of-8 divisor of m whose tile fits the VMEM budget.

    If m is not 8-aligned, the block must equal the full dim (BlockSpec rule:
    block dims are multiples of (8, 128) or equal to the full array dims).
    """
    if m % 8 != 0:
        return m
    max_rows = max(8, _TILE_BYTES_BUDGET // max(bytes_per_row, 1))
    tm = min(m, max_rows)
    tm -= tm % 8
    tm = max(tm, 8)
    while m % tm:
        tm -= 8
    return tm


def normal_regressor(x, weight, bias, pool=False):
    """Pallas implementation of NormalRegressor1.forward.

    x:      (..., E) for pool=False, (B, S, E) for pool=True  (float32)
    weight: (1, E)  -- nn.Linear(embed_dim, 1).weight, PyTorch layout
    bias:   (1,)    -- nn.Linear(embed_dim, 1).bias
    """
    E = weight.shape[-1]
    w = weight.reshape(1, E).astype(jnp.float32)
    b = bias.reshape(1, 1).astype(jnp.float32)

    if pool:
        B, S, _ = x.shape
        tb = _row_block(B, bytes_per_row=4 * S * E)
        grid = (B // tb,)
        out = pl.pallas_call(
            functools.partial(_pool_linear_kernel, inv_seq=1.0 / S),
            out_shape=jax.ShapeDtypeStruct((B, 1), jnp.float32),
            grid=grid,
            in_specs=[
                pl.BlockSpec((tb, S, E), lambda i: (i, 0, 0)),
                pl.BlockSpec((1, E), lambda i: (0, 0)),
                pl.BlockSpec((1, 1), lambda i: (0, 0)),
            ],
            out_specs=pl.BlockSpec((tb, 1), lambda i: (i, 0)),
            compiler_params=pltpu.CompilerParams(
                dimension_semantics=("parallel",)),
            cost_estimate=pl.CostEstimate(
                flops=2 * B * S * E + 2 * B * E,
                transcendentals=0,
                bytes_accessed=4 * (B * S * E + E + 1 + B)),
        )(x, w, b)
        return out                                        # (B, 1)

    # pool=False: Linear applied to the last dim of any-rank input.
    lead_shape = x.shape[:-1]
    M = int(math.prod(lead_shape)) if lead_shape else 1
    x2 = x.reshape(M, E)
    tm = _row_block(M, bytes_per_row=4 * E)
    grid = (M // tm,)
    out = pl.pallas_call(
        _linear_kernel,
        out_shape=jax.ShapeDtypeStruct((M, 1), jnp.float32),
        grid=grid,
        in_specs=[
            pl.BlockSpec((tm, E), lambda i: (i, 0)),
            pl.BlockSpec((1, E), lambda i: (0, 0)),
            pl.BlockSpec((1, 1), lambda i: (0, 0)),
        ],
        out_specs=pl.BlockSpec((tm, 1), lambda i: (i, 0)),
        compiler_params=pltpu.CompilerParams(
            dimension_semantics=("parallel",)),
        cost_estimate=pl.CostEstimate(
            flops=2 * M * E,
            transcendentals=0,
            bytes_accessed=4 * (M * E + E + 1 + M)),
    )(x2, w, b)
    return out.reshape(lead_shape + (1,))


# ---------------------------------------------------------------------------
# Pure-JAX reference mirroring the PyTorch module
# ---------------------------------------------------------------------------
def reference_normal_regressor(x, weight, bias, pool=False):
    x = x.astype(jnp.float32)
    if pool:
        # x.permute(0,2,1) -> AdaptiveAvgPool1d(1) -> squeeze(2)  == mean over seq
        x = jnp.mean(x, axis=1)                           # (B, E)
    return x @ weight.T + bias                            # Linear(E, 1)


# ---------------------------------------------------------------------------
if __name__ == "__main__":
    # TODO(synk): the pool branch's host-side `print('Shape of x ...')` debug
    # statement has no tensor-op equivalent and is intentionally omitted.
    B, S, E = 2, 8, 32
    key = jax.random.PRNGKey(0)
    kx, kw, kb = jax.random.split(key, 3)
    x = jax.random.normal(kx, (B, S, E), jnp.float32)
    weight = 0.1 * jax.random.normal(kw, (1, E), jnp.float32)   # fc1.weight
    bias = 0.1 * jax.random.normal(kb, (1,), jnp.float32)       # fc1.bias

    # pool=False path: Linear(E, 1) on the last dim -> (B, S, 1)
    out = jax.block_until_ready(normal_regressor(x, weight, bias, pool=False))
    ref = reference_normal_regressor(x, weight, bias, pool=False)
    assert out.shape == (B, S, 1)
    assert jnp.allclose(out, ref, atol=1e-4, rtol=1e-4), "pool=False mismatch"

    # pool=True path: mean over seq then Linear -> (B, 1)
    out_p = jax.block_until_ready(normal_regressor(x, weight, bias, pool=True))
    ref_p = reference_normal_regressor(x, weight, bias, pool=True)
    assert out_p.shape == (B, 1)
    assert jnp.allclose(out_p, ref_p, atol=1e-4, rtol=1e-4), "pool=True mismatch"

    print("KERNEL_OK")
</pallas_src>

<mosaic_0001>
module attributes {stable_mosaic.version = 11 : i64} {
  func.func @_linear_kernel(%arg0: i32, %arg1: memref<16x32xf32, #tpu.memory_space<vmem>>, %arg2: memref<1x32xf32, #tpu.memory_space<vmem>>, %arg3: memref<1x1xf32, #tpu.memory_space<vmem>>, %arg4: memref<16x1xf32, #tpu.memory_space<vmem>>) attributes {dimension_semantics = [#tpu.dimension_semantics<parallel>], iteration_bounds = array<i64: 1>, scalar_prefetch = 0 : i64, scratch_operands = 0 : i64, tpu.core_type = #tpu.core_type<tc>, window_params = [{transform_indices = @transform_0, window_bounds = array<i64: 16, 32>}, {pipeline_mode = #tpu.pipeline_mode<synchronous>, transform_indices = @transform_1, window_bounds = array<i64: 1, 32>}, {pipeline_mode = #tpu.pipeline_mode<synchronous>, transform_indices = @transform_2, window_bounds = array<i64: 1, 1>}, {transform_indices = @transform_3, window_bounds = array<i64: 16, 1>}]} {
    %c0 = arith.constant 0 : index
    %c0_0 = arith.constant 0 : index
    %0 = vector.load %arg1[%c0, %c0_0] : memref<16x32xf32, #tpu.memory_space<vmem>>, vector<16x32xf32>
    %c0_1 = arith.constant 0 : index
    %c0_2 = arith.constant 0 : index
    %1 = vector.load %arg2[%c0_1, %c0_2] : memref<1x32xf32, #tpu.memory_space<vmem>>, vector<1x32xf32>
    %2 = vector.broadcast %1 : vector<1x32xf32> to vector<16x32xf32>
    %3 = arith.mulf %0, %2 : vector<16x32xf32>
    %cst = arith.constant dense<0.000000e+00> : vector<16xf32>
    %4 = vector.multi_reduction <add>, %3, %cst [1] : vector<16x32xf32> to vector<16xf32>
    %5 = vector.shape_cast %4 : vector<16xf32> to vector<16x1xf32>
    %c0_3 = arith.constant 0 : index
    %c0_4 = arith.constant 0 : index
    %6 = vector.load %arg3[%c0_3, %c0_4] : memref<1x1xf32, #tpu.memory_space<vmem>>, vector<1x1xf32>
    %7 = vector.broadcast %6 : vector<1x1xf32> to vector<16x1xf32>
    %8 = arith.addf %5, %7 : vector<16x1xf32>
    %c0_5 = arith.constant 0 : index
    %c0_6 = arith.constant 0 : index
    %9 = vector.load %arg4[%c0_5, %c0_6] : memref<16x1xf32, #tpu.memory_space<vmem>>, vector<16x1xf32>
    tpu.vector_store %arg4[%c0_5, %c0_6], %8 {strides = array<i32>} : memref<16x1xf32, #tpu.memory_space<vmem>>, vector<16x1xf32>,
    return
  }
  func.func @transform_0(%arg0: i32) -> (i32, i32) {
    %c0_i32 = arith.constant 0 : i32
    %c0_i32_0 = arith.constant 0 : i32
    return %arg0, %c0_i32 : i32, i32
  }
  func.func @transform_1(%arg0: i32) -> (i32, i32) {
    %c0_i32 = arith.constant 0 : i32
    %c0_i32_0 = arith.constant 0 : i32
    %c0_i32_1 = arith.constant 0 : i32
    return %c0_i32, %c0_i32_0 : i32, i32
  }
  func.func @transform_2(%arg0: i32) -> (i32, i32) {
    %c0_i32 = arith.constant 0 : i32
    %c0_i32_0 = arith.constant 0 : i32
    %c0_i32_1 = arith.constant 0 : i32
    return %c0_i32, %c0_i32_0 : i32, i32
  }
  func.func @transform_3(%arg0: i32) -> (i32, i32) {
    %c0_i32 = arith.constant 0 : i32
    %c0_i32_0 = arith.constant 0 : i32
    return %arg0, %c0_i32 : i32, i32
  }
}

</mosaic_0001>

<llo_original>
// kernel: tpu_custom_call.1
$region0: #{tpu_custom_call.1}
  #allocation0 [shape = 'u32[]', space=smem, size = 0x4, offset = 0x4, fixed_abs, tag = 'smem constant byte address 0x4 - core index']
  #allocation1 [shape = 'u32[144,128]{1,0:T(1,128)}', space=vmem, size = 0x12000, scoped, tag = 'internal scratch']
  #allocation2 [shape = 'f32[1,1]{1,0:T(1,128)S(1)}', space=vmem, size = 0x200, scoped, tag = 'scoped memory for tpu_custom_call.1']
  %s0 = inlined_call_operand.hbm [shape: f32[16,32], index: 0, kind: input, shape index: {}]
  %s1 = inlined_call_operand.vmem [shape: f32[1,32], index: 1, kind: input, shape index: {}]
  %s2 = inlined_call_operand.<no memory space> [shape: f32[1,1], index: 2, kind: input, shape index: {}]
  %s3 = inlined_call_operand.vmem [shape: f32[16,1], index: 3, kind: output, shape index: {}]
  %s4 = sld [smem:[#allocation0]]
  $region26: #{tpu_custom_call.1} parent=0
    _
  %s6 = ssub.s32 1, %s4
  %s7 = scalar_select 0, %s6, %s4
  %v8 = vstv %s2
  %9 = vst [vmem:[#allocation2] sm:$0x1] %v8
  $region1: #{tpu_custom_call.1} parent=0
    #allocation3 [shape = 'u8[8192]{0}', space=vmem, size = 0x2000, scoped, tag = 'input window, operand 0, single buffered']
    #allocation4 [shape = 's32[1]{0}', space=sflag, size = 0x4, scoped, tag = 'scoped memory for tpu_custom_call.1']
    %10 = vsyncpa [#allocation4], 0
    // Predicated region
    $region2: #{tpu_custom_call.1} parent=1 // pred_check
      _
    $region3: #{tpu_custom_call.1} parent=1 // pred_check_branch
      %12 = sbr.rel (0) target = $region5
    $region4: #{tpu_custom_call.1} parent=1 // pred_region
      %s14 = ssub.s32 256, 256
      %15 = vsyncadd [#allocation4], %s14
      %s16 = sshll.u32 [#allocation3], 4
      %s17 = int_to_ptr.vmem [resolvable:$true] %s16
      %22 = dma.hbm_to_vmem [thread:$0]  %s0, 256, %s17, [#allocation4], 128, 128, 8
    $region5: #{tpu_custom_call.1} parent=1 // pred_fallthru
      _
    // Predicated region
    $region6: #{tpu_custom_call.1} parent=1 // pred_check
      _
    $region7: #{tpu_custom_call.1} parent=1 // pred_check_branch
      %24 = sbr.rel (0) target = $region9
    $region8: #{tpu_custom_call.1} parent=1 // pred_region
      _
    $region9: #{tpu_custom_call.1} parent=1 // pred_fallthru
      _
    // Predicated region
    $region10: #{tpu_custom_call.1} parent=1 // pred_check
      _
    $region11: #{tpu_custom_call.1} parent=1 // pred_check_branch
      %26 = sbr.rel (0) target = $region13
    $region12: #{tpu_custom_call.1} parent=1 // pred_region
      _
    $region13: #{tpu_custom_call.1} parent=1 // pred_fallthru
      _
    // Predicated region
    $region14: #{tpu_custom_call.1} parent=1 // pred_check
      _
    $region15: #{tpu_custom_call.1} parent=1 // pred_check_branch
      %28 = sbr.rel (0) target = $region17
    $region16: #{tpu_custom_call.1} parent=1 // pred_region
      %29 = dma.done [#allocation4], 256
    $region17: #{tpu_custom_call.1} parent=1 // pred_fallthru
      _
    %v30 = vld [vmem:[#allocation3] sm:$0xff]
    %v31 = vld [vmem:[#allocation3 + $0x8] sm:$0xff]
    %v32 = vld [vmem:[%s1] sm:$0x1]
    %v34 = vlaneseq
    %v35 = vshrl.u32 %v34, 7
    %v36 = vsub.s32 0, %v35
    %v37 = vrot.slane %v32, %v36
    %v39 = vmul.f32 %v30, %v37
    %v40 = vmul.f32 %v31, %v37
    %vm41 = vcmask 261120
    %v42 = vsel %vm41, %v39, 0.0
    %43 = vadd.xlane.f32.xlu0 %v42
    %v44 = vpop.xlane.xlu0 %43
    %v45 = vsel %vm41, %v40, 0.0
    %46 = vadd.xlane.f32.xlu0 %v45
    %v47 = vpop.xlane.xlu0 %46
    %v48 = vld [vmem:[#allocation2] sm:$0x1]
    %v50 = vlaneseq
    %v51 = vshrl.u32 %v50, 7
    %v52 = vsub.s32 0, %v51
    %v53 = vrot.slane %v48, %v52
    %v55 = vadd.f32 %v44, %v53
    %v56 = vadd.f32 %v47, %v53
    %vm57 = vcmask 7168
    %58 = vst.msk [vmem:[%s3] sm:$0xff] %vm57, %v55
    %59 = vst.msk [vmem:[%s3 + $0x8] sm:$0xff] %vm57, %v56
    // Predicated region
    $region18: #{tpu_custom_call.1} parent=1 // pred_check
      _
    $region19: #{tpu_custom_call.1} parent=1 // pred_check_branch
      %61 = sbr.rel (0) target = $region21
    $region20: #{tpu_custom_call.1} parent=1 // pred_region
      _
    $region21: #{tpu_custom_call.1} parent=1 // pred_fallthru
      _
    // Predicated region
    $region22: #{tpu_custom_call.1} parent=1 // pred_check
      _
    $region23: #{tpu_custom_call.1} parent=1 // pred_check_branch
      %63 = sbr.rel (0) target = $region25
    $region24: #{tpu_custom_call.1} parent=1 // pred_region
      _
    $region25: #{tpu_custom_call.1} parent=1 // pred_fallthru
      _
    %64 = vsyncpa [#allocation4], 1

</llo_original>
